<compile_context>
chip_gen: v6e
topology: v6e:2x2x1
jax: 0.10.0
libtpu: 0.0.40
codegen_flags: <defaults>
</compile_context>

<pallas_src>
import functools

import jax
import jax.numpy as jnp
from jax import lax
from jax.experimental import pallas as pl
from jax.experimental.pallas import tpu as pltpu


def _round_up(x, m):
    return ((x + m - 1) // m) * m


def _choose_tile(b, tb_max, min_steps=2):
    """Pick a batch tile: multiple of 8, <= tb_max-ish, >= min_steps grid steps
    when the batch permits, and never padding far past the batch size."""
    b8 = _round_up(b, 8)
    if b8 <= 8 * min_steps:
        return b8
    n_steps = max(min_steps, pl.cdiv(b8, tb_max))
    return _round_up(pl.cdiv(b8, n_steps), 8)


def improved_coral_kernel(theta_ref, alpha_ref, betas_ref, w1_ref, w2_ref,
                          pp_ref, logits_ref, probs_ref, *, km1):
    """One batch tile: (TB,) rows -> logits (TB, km1) and CORN probs (TB, km1+1)."""
    theta = theta_ref[...]                         # (TB, 1)
    alpha = alpha_ref[...]                         # (TB, 1)
    betas = betas_ref[...]                         # (TB, km1)
    w1 = w1_ref[...]                               # (irt_dim, 64)

    # Packed small parameters (one resident VMEM tile instead of 4 tiny inputs).
    b1_row = pp_ref[0:1, 0:64]                     # (1, 64)
    b2_row = pp_ref[1:2, 0:32]                     # (1, 32)
    wc_row = pp_ref[2:3, 0:32]                     # (1, 32)  coral fc weight
    cb_pad = pp_ref[3:4, :]                        # (1, 128) coral bias, ZERO padded
                                                   #          (keeps sigmoid finite in pad lanes)

    # --- Layer 1: x @ W1^T + b1, with the concat decomposed as
    #     theta * W1t[0] + alpha * W1t[1] + betas @ W1t[2:]   (no concat needed)
    h1 = jnp.dot(betas, w1[2:, :], preferred_element_type=jnp.float32)
    h1 = h1 + theta * w1[0:1, :] + alpha * w1[1:2, :] + b1_row
    h1 = jnp.maximum(h1, 0.0)                      # (TB, 64)

    # --- Layer 2: Linear(64, 32) + ReLU ---
    h2 = jnp.dot(h1, w2_ref[...], preferred_element_type=jnp.float32) + b2_row
    h2 = jnp.maximum(h2, 0.0)                      # (TB, 32)

    # --- Coral projection (output width 1): VPU multiply + lane reduce, not MXU ---
    fc = jnp.sum(h2 * wc_row, axis=-1, keepdims=True)   # (TB, 1)
    logits_pad = fc + cb_pad                             # (TB, 128); lanes [0, km1) valid

    # Narrow logits store (lane-0-anchored slice of the 128-wide slab).
    logits_ref[...] = logits_pad[:, :km1]

    # --- CORN probabilities ---
    col = lax.broadcasted_iota(jnp.int32, logits_pad.shape, 1)   # lane index
    sig = jax.nn.sigmoid(logits_pad)               # single EUP transcendental pass

    # Inclusive prefix product over lanes (Hillis-Steele, ceil(log2(km1)) XLU rolls).
    cum = sig
    s = 1
    while s < km1:
        rolled = pltpu.roll(cum, s, axis=1)        # rolled[j] = cum[j - s]
        cum = cum * jnp.where(col >= s, rolled, 1.0)
        s *= 2
    # cum lanes [0, km1): P(y > k); padding lanes hold finite garbage (sliced off).

    # probs[k] = P(y > k-1) - P(y > k), with P(y > -1) = 1 and P(y > km1-1) kept whole.
    upper = jnp.where(col == 0, 1.0, pltpu.roll(cum, 1, axis=1))   # upper[k] = cum[k-1], upper[0] = 1
    lower = jnp.where(col == km1, 0.0, cum)                        # lower[k] = cum[k],  lower[km1] = 0
    probs_ref[...] = (upper - lower)[:, :km1 + 1]


def improved_coral_forward(theta, alpha, betas, params, num_classes, *, tb=2048):
    """Wrapper: pick batch tile, pad minimally, launch batch-gridded kernel."""
    km1 = num_classes - 1
    # Internal 128-lane slab + circular rolls require km1 + 1 <= 128.
    assert num_classes <= 128, "num_classes must be <= 128 for this kernel layout"
    b = theta.shape[0]
    irt_dim = betas.shape[1] + 2

    theta2 = theta.reshape(b, 1).astype(jnp.float32)
    alpha2 = alpha.reshape(b, 1).astype(jnp.float32)
    betas2 = betas.astype(jnp.float32)

    tb = _choose_tile(b, tb)                       # rows per grid step (multiple of 8)
    b_pad = _round_up(b, tb)
    if b_pad != b:
        pad = b_pad - b
        theta2 = jnp.pad(theta2, ((0, pad), (0, 0)))
        alpha2 = jnp.pad(alpha2, ((0, pad), (0, 0)))
        betas2 = jnp.pad(betas2, ((0, pad), (0, 0)))

    kernel = functools.partial(improved_coral_kernel, km1=km1)
    logits, probs = pl.pallas_call(
        kernel,
        out_shape=(jax.ShapeDtypeStruct((b_pad, km1), jnp.float32),
                   jax.ShapeDtypeStruct((b_pad, km1 + 1), jnp.float32)),
        grid_spec=pltpu.PrefetchScalarGridSpec(
            num_scalar_prefetch=0,
            grid=(b_pad // tb,),
            in_specs=[
                pl.BlockSpec((tb, 1), lambda i: (i, 0)),        # theta
                pl.BlockSpec((tb, 1), lambda i: (i, 0)),        # alpha
                pl.BlockSpec((tb, km1), lambda i: (i, 0)),      # betas
                pl.BlockSpec((irt_dim, 64), lambda i: (0, 0)),  # W1^T (resident)
                pl.BlockSpec((64, 32), lambda i: (0, 0)),       # W2^T (resident)
                pl.BlockSpec((4, 128), lambda i: (0, 0)),       # packed biases/coral
            ],
            out_specs=[
                pl.BlockSpec((tb, km1), lambda i: (i, 0)),      # logits (narrow)
                pl.BlockSpec((tb, km1 + 1), lambda i: (i, 0)),  # probs  (narrow)
            ],
        ),
        compiler_params=pltpu.CompilerParams(
            dimension_semantics=("parallel",)),
    )(theta2, alpha2, betas2, params["w1_t"], params["w2_t"], params["pp"])

    if b_pad != b:
        logits = logits[:b]
        probs = probs[:b]
    return logits, probs


def init_params(key, irt_feature_dim, num_classes):
    """Deterministic synthetic parameters (shapes match the nn.Module __init__)."""
    ks = jax.random.split(key, 6)
    w1 = jax.random.normal(ks[0], (64, irt_feature_dim), jnp.float32) * 0.2
    b1 = jax.random.normal(ks[1], (64,), jnp.float32) * 0.05
    w2 = jax.random.normal(ks[2], (32, 64), jnp.float32) * 0.2
    b2 = jax.random.normal(ks[3], (32,), jnp.float32) * 0.05
    wc = jax.random.normal(ks[4], (1, 32), jnp.float32) * 0.2       # Linear(32,1,bias=False)
    coral_bias = jax.random.normal(ks[5], (num_classes - 1,), jnp.float32) * 0.1

    # Pack small params into one lane-dense (4, 128) slab (zero padding matters:
    # keeps sigmoid of padded logit lanes finite inside the kernel).
    pp = jnp.zeros((4, 128), jnp.float32)
    pp = pp.at[0, :64].set(b1)
    pp = pp.at[1, :32].set(b2)
    pp = pp.at[2, :32].set(wc[0])
    pp = pp.at[3, :num_classes - 1].set(coral_bias)

    return {
        "w1_t": jnp.asarray(w1.T),                 # (irt_dim, 64)
        "w2_t": jnp.asarray(w2.T),                 # (64, 32)
        "pp": pp,                                  # (4, 128) packed small params
        # raw copies for the pure-JAX reference
        "w1": w1, "b1": b1, "w2": w2, "b2": b2, "wc": wc, "coral_bias": coral_bias,
    }


def reference_forward(theta, alpha, betas, params):
    """Pure-JAX reference of the module's forward (eval mode)."""
    x = jnp.concatenate([theta[:, None], alpha[:, None], betas], axis=-1)
    h1 = jax.nn.relu(x @ params["w1"].T + params["b1"])
    h2 = jax.nn.relu(h1 @ params["w2"].T + params["b2"])
    logits = h2 @ params["wc"].T + params["coral_bias"]
    sig = jax.nn.sigmoid(logits)
    cum = jnp.cumprod(sig, axis=-1)
    upper = jnp.concatenate([jnp.ones_like(cum[:, :1]), cum], axis=-1)
    lower = jnp.concatenate([cum, jnp.zeros_like(cum[:, :1])], axis=-1)
    return logits, upper - lower


if __name__ == "__main__":
    K = 5                        # num_classes
    IRT_DIM = K + 1              # theta + alpha + (K-1) betas

    key = jax.random.PRNGKey(0)
    k_theta, k_alpha, k_betas, k_params = jax.random.split(key, 4)
    params = init_params(k_params, IRT_DIM, K)

    # Case 1: tiny batch (single grid step).
    B = 8
    theta = jax.random.normal(k_theta, (B,), jnp.float32)
    alpha = jax.random.normal(k_alpha, (B,), jnp.float32)
    betas = jax.random.normal(k_betas, (B, K - 1), jnp.float32)

    logits, probs = improved_coral_forward(theta, alpha, betas, params, K)
    jax.block_until_ready((logits, probs))

    assert logits.shape == (B, K - 1)
    assert probs.shape == (B, K)
    assert jnp.allclose(jnp.sum(probs, axis=-1), 1.0, atol=1e-5)

    ref_logits, ref_probs = reference_forward(theta, alpha, betas, params)
    assert jnp.allclose(logits, ref_logits, atol=1e-5)
    assert jnp.allclose(probs, ref_probs, atol=1e-5)

    # Case 2: ragged batch (exercises padding + multi-step grid / megacore path).
    B2 = 300
    theta2 = jax.random.normal(jax.random.PRNGKey(1), (B2,), jnp.float32)
    alpha2 = jax.random.normal(jax.random.PRNGKey(2), (B2,), jnp.float32)
    betas2 = jax.random.normal(jax.random.PRNGKey(3), (B2, K - 1), jnp.float32)

    logits2, probs2 = improved_coral_forward(theta2, alpha2, betas2, params, K)
    jax.block_until_ready((logits2, probs2))
    ref_logits2, ref_probs2 = reference_forward(theta2, alpha2, betas2, params)
    assert logits2.shape == (B2, K - 1) and probs2.shape == (B2, K)
    assert jnp.allclose(logits2, ref_logits2, atol=1e-5)
    assert jnp.allclose(probs2, ref_probs2, atol=1e-5)

    print("KERNEL_OK")
</pallas_src>

<mosaic_0001>
module attributes {stable_mosaic.version = 11 : i64} {
  func.func @improved_coral_kernel(%arg0: i32, %arg1: memref<8x1xf32, #tpu.memory_space<vmem>>, %arg2: memref<8x1xf32, #tpu.memory_space<vmem>>, %arg3: memref<8x4xf32, #tpu.memory_space<vmem>>, %arg4: memref<6x64xf32, #tpu.memory_space<vmem>>, %arg5: memref<64x32xf32, #tpu.memory_space<vmem>>, %arg6: memref<4x128xf32, #tpu.memory_space<vmem>>, %arg7: memref<8x4xf32, #tpu.memory_space<vmem>>, %arg8: memref<8x5xf32, #tpu.memory_space<vmem>>) attributes {dimension_semantics = [#tpu.dimension_semantics<parallel>], iteration_bounds = array<i64: 1>, scalar_prefetch = 0 : i64, scratch_operands = 0 : i64, tpu.core_type = #tpu.core_type<tc>, window_params = [{transform_indices = @transform_0, window_bounds = array<i64: 8, 1>}, {transform_indices = @transform_1, window_bounds = array<i64: 8, 1>}, {transform_indices = @transform_2, window_bounds = array<i64: 8, 4>}, {pipeline_mode = #tpu.pipeline_mode<synchronous>, transform_indices = @transform_3, window_bounds = array<i64: 6, 64>}, {pipeline_mode = #tpu.pipeline_mode<synchronous>, transform_indices = @transform_4, window_bounds = array<i64: 64, 32>}, {pipeline_mode = #tpu.pipeline_mode<synchronous>, transform_indices = @transform_5, window_bounds = array<i64: 4, 128>}, {transform_indices = @transform_6, window_bounds = array<i64: 8, 4>}, {transform_indices = @transform_7, window_bounds = array<i64: 8, 5>}]} {
    %c0 = arith.constant 0 : index
    %c0_0 = arith.constant 0 : index
    %0 = vector.load %arg1[%c0, %c0_0] : memref<8x1xf32, #tpu.memory_space<vmem>>, vector<8x1xf32>
    %c0_1 = arith.constant 0 : index
    %c0_2 = arith.constant 0 : index
    %1 = vector.load %arg2[%c0_1, %c0_2] : memref<8x1xf32, #tpu.memory_space<vmem>>, vector<8x1xf32>
    %c0_3 = arith.constant 0 : index
    %c0_4 = arith.constant 0 : index
    %2 = vector.load %arg3[%c0_3, %c0_4] : memref<8x4xf32, #tpu.memory_space<vmem>>, vector<8x4xf32>
    %c0_5 = arith.constant 0 : index
    %c0_6 = arith.constant 0 : index
    %3 = vector.load %arg4[%c0_5, %c0_6] : memref<6x64xf32, #tpu.memory_space<vmem>>, vector<6x64xf32>
    %c0_7 = arith.constant 0 : index
    %c0_8 = arith.constant 0 : index
    %4 = vector.load %arg6[%c0_7, %c0_8] : memref<4x128xf32, #tpu.memory_space<vmem>>, vector<1x64xf32>
    %c1 = arith.constant 1 : index
    %c0_9 = arith.constant 0 : index
    %5 = vector.load %arg6[%c1, %c0_9] : memref<4x128xf32, #tpu.memory_space<vmem>>, vector<1x32xf32>
    %c2 = arith.constant 2 : index
    %c0_10 = arith.constant 0 : index
    %6 = vector.load %arg6[%c2, %c0_10] : memref<4x128xf32, #tpu.memory_space<vmem>>, vector<1x32xf32>
    %c3 = arith.constant 3 : index
    %c0_11 = arith.constant 0 : index
    %7 = vector.load %arg6[%c3, %c0_11] : memref<4x128xf32, #tpu.memory_space<vmem>>, vector<1x128xf32>
    %8 = vector.extract_strided_slice %3 {offsets = [2, 0], sizes = [4, 64], strides = [1, 1]} : vector<6x64xf32> to vector<4x64xf32>
    %cst = arith.constant dense<0.000000e+00> : vector<8x64xf32>
    %9 = tpu.matmul %2, %8, %cst {dimension_numbers = #tpu.dot_dimension_numbers<[1], [0], [0], [1], [0, 0, 1, 1], [], []>} : vector<8x4xf32>, vector<4x64xf32>, vector<8x64xf32> -> vector<8x64xf32>
    %10 = vector.extract_strided_slice %3 {offsets = [0, 0], sizes = [1, 64], strides = [1, 1]} : vector<6x64xf32> to vector<1x64xf32>
    %11 = vector.broadcast %0 : vector<8x1xf32> to vector<8x64xf32>
    %12 = vector.broadcast %10 : vector<1x64xf32> to vector<8x64xf32>
    %13 = arith.mulf %11, %12 : vector<8x64xf32>
    %14 = arith.addf %9, %13 : vector<8x64xf32>
    %15 = vector.extract_strided_slice %3 {offsets = [1, 0], sizes = [1, 64], strides = [1, 1]} : vector<6x64xf32> to vector<1x64xf32>
    %16 = vector.broadcast %1 : vector<8x1xf32> to vector<8x64xf32>
    %17 = vector.broadcast %15 : vector<1x64xf32> to vector<8x64xf32>
    %18 = arith.mulf %16, %17 : vector<8x64xf32>
    %19 = arith.addf %14, %18 : vector<8x64xf32>
    %20 = vector.broadcast %4 : vector<1x64xf32> to vector<8x64xf32>
    %21 = arith.addf %19, %20 : vector<8x64xf32>
    %cst_12 = arith.constant 0.000000e+00 : f32
    %22 = vector.broadcast %cst_12 : f32 to vector<8x64xf32>
    %23 = arith.maximumf %21, %22 : vector<8x64xf32>
    %c0_13 = arith.constant 0 : index
    %c0_14 = arith.constant 0 : index
    %24 = vector.load %arg5[%c0_13, %c0_14] : memref<64x32xf32, #tpu.memory_space<vmem>>, vector<64x32xf32>
    %cst_15 = arith.constant dense<0.000000e+00> : vector<8x32xf32>
    %25 = tpu.matmul %23, %24, %cst_15 {dimension_numbers = #tpu.dot_dimension_numbers<[1], [0], [0], [1], [0, 0, 1, 1], [], []>} : vector<8x64xf32>, vector<64x32xf32>, vector<8x32xf32> -> vector<8x32xf32>
    %26 = vector.broadcast %5 : vector<1x32xf32> to vector<8x32xf32>
    %27 = arith.addf %25, %26 : vector<8x32xf32>
    %cst_16 = arith.constant 0.000000e+00 : f32
    %28 = vector.broadcast %cst_16 : f32 to vector<8x32xf32>
    %29 = arith.maximumf %27, %28 : vector<8x32xf32>
    %30 = vector.broadcast %6 : vector<1x32xf32> to vector<8x32xf32>
    %31 = arith.mulf %29, %30 : vector<8x32xf32>
    %cst_17 = arith.constant dense<0.000000e+00> : vector<8xf32>
    %32 = vector.multi_reduction <add>, %31, %cst_17 [1] : vector<8x32xf32> to vector<8xf32>
    %33 = vector.shape_cast %32 : vector<8xf32> to vector<8x1xf32>
    %34 = vector.broadcast %33 : vector<8x1xf32> to vector<8x128xf32>
    %35 = vector.broadcast %7 : vector<1x128xf32> to vector<8x128xf32>
    %36 = arith.addf %34, %35 : vector<8x128xf32>
    %37 = vector.extract_strided_slice %36 {offsets = [0, 0], sizes = [8, 4], strides = [1, 1]} : vector<8x128xf32> to vector<8x4xf32>
    %c0_18 = arith.constant 0 : index
    %c0_19 = arith.constant 0 : index
    %38 = vector.load %arg7[%c0_18, %c0_19] : memref<8x4xf32, #tpu.memory_space<vmem>>, vector<8x4xf32>
    tpu.vector_store %arg7[%c0_18, %c0_19], %37 {strides = array<i32>} : memref<8x4xf32, #tpu.memory_space<vmem>>, vector<8x4xf32>,
    %39 = tpu.iota {dimensions = array<i32: 1>} : vector<8x128xi32>
    %40 = arith.negf %36 : vector<8x128xf32>
    %41 = math.exp %40 : vector<8x128xf32>
    %cst_20 = arith.constant 1.000000e+00 : f32
    %42 = vector.broadcast %cst_20 : f32 to vector<8x128xf32>
    %43 = arith.addf %42, %41 : vector<8x128xf32>
    %44 = arith.divf %42, %43 : vector<8x128xf32>
    %c1_i32 = arith.constant 1 : i32
    %45 = tpu.dynamic_rotate %44 by %c1_i32 dim 1 : vector<8x128xf32>, i32 -> vector<8x128xf32>
    %c1_i32_21 = arith.constant 1 : i32
    %46 = vector.broadcast %c1_i32_21 : i32 to vector<8x128xi32>
    %47 = arith.cmpi sge, %39, %46 : vector<8x128xi32>
    %cst_22 = arith.constant 1.000000e+00 : f32
    %48 = vector.broadcast %cst_22 : f32 to vector<8x128xf32>
    %49 = arith.select %47, %45, %48 : vector<8x128xi1>, vector<8x128xf32>
    %50 = arith.mulf %44, %49 : vector<8x128xf32>
    %c2_i32 = arith.constant 2 : i32
    %51 = tpu.dynamic_rotate %50 by %c2_i32 dim 1 : vector<8x128xf32>, i32 -> vector<8x128xf32>
    %c2_i32_23 = arith.constant 2 : i32
    %52 = vector.broadcast %c2_i32_23 : i32 to vector<8x128xi32>
    %53 = arith.cmpi sge, %39, %52 : vector<8x128xi32>
    %cst_24 = arith.constant 1.000000e+00 : f32
    %54 = vector.broadcast %cst_24 : f32 to vector<8x128xf32>
    %55 = arith.select %53, %51, %54 : vector<8x128xi1>, vector<8x128xf32>
    %56 = arith.mulf %50, %55 : vector<8x128xf32>
    %c0_i32 = arith.constant 0 : i32
    %57 = vector.broadcast %c0_i32 : i32 to vector<8x128xi32>
    %58 = arith.cmpi eq, %39, %57 : vector<8x128xi32>
    %c1_i32_25 = arith.constant 1 : i32
    %59 = tpu.dynamic_rotate %56 by %c1_i32_25 dim 1 : vector<8x128xf32>, i32 -> vector<8x128xf32>
    %cst_26 = arith.constant 1.000000e+00 : f32
    %60 = vector.broadcast %cst_26 : f32 to vector<8x128xf32>
    %61 = arith.select %58, %60, %59 : vector<8x128xi1>, vector<8x128xf32>
    %c4_i32 = arith.constant 4 : i32
    %62 = vector.broadcast %c4_i32 : i32 to vector<8x128xi32>
    %63 = arith.cmpi eq, %39, %62 : vector<8x128xi32>
    %cst_27 = arith.constant 0.000000e+00 : f32
    %64 = vector.broadcast %cst_27 : f32 to vector<8x128xf32>
    %65 = arith.select %63, %64, %56 : vector<8x128xi1>, vector<8x128xf32>
    %66 = arith.subf %61, %65 : vector<8x128xf32>
    %67 = vector.extract_strided_slice %66 {offsets = [0, 0], sizes = [8, 5], strides = [1, 1]} : vector<8x128xf32> to vector<8x5xf32>
    %c0_28 = arith.constant 0 : index
    %c0_29 = arith.constant 0 : index
    %68 = vector.load %arg8[%c0_28, %c0_29] : memref<8x5xf32, #tpu.memory_space<vmem>>, vector<8x5xf32>
    tpu.vector_store %arg8[%c0_28, %c0_29], %67 {strides = array<i32>} : memref<8x5xf32, #tpu.memory_space<vmem>>, vector<8x5xf32>,
    return
  }
  func.func @transform_0(%arg0: i32) -> (i32, i32) {
    %c0_i32 = arith.constant 0 : i32
    %c0_i32_0 = arith.constant 0 : i32
    return %arg0, %c0_i32 : i32, i32
  }
  func.func @transform_1(%arg0: i32) -> (i32, i32) {
    %c0_i32 = arith.constant 0 : i32
    %c0_i32_0 = arith.constant 0 : i32
    return %arg0, %c0_i32 : i32, i32
  }
  func.func @transform_2(%arg0: i32) -> (i32, i32) {
    %c0_i32 = arith.constant 0 : i32
    %c0_i32_0 = arith.constant 0 : i32
    return %arg0, %c0_i32 : i32, i32
  }
  func.func @transform_3(%arg0: i32) -> (i32, i32) {
    %c0_i32 = arith.constant 0 : i32
    %c0_i32_0 = arith.constant 0 : i32
    %c0_i32_1 = arith.constant 0 : i32
    return %c0_i32, %c0_i32_0 : i32, i32
  }
  func.func @transform_4(%arg0: i32) -> (i32, i32) {
    %c0_i32 = arith.constant 0 : i32
    %c0_i32_0 = arith.constant 0 : i32
    %c0_i32_1 = arith.constant 0 : i32
    return %c0_i32, %c0_i32_0 : i32, i32
  }
  func.func @transform_5(%arg0: i32) -> (i32, i32) {
    %c0_i32 = arith.constant 0 : i32
    %c0_i32_0 = arith.constant 0 : i32
    %c0_i32_1 = arith.constant 0 : i32
    return %c0_i32, %c0_i32_0 : i32, i32
  }
  func.func @transform_6(%arg0: i32) -> (i32, i32) {
    %c0_i32 = arith.constant 0 : i32
    %c0_i32_0 = arith.constant 0 : i32
    return %arg0, %c0_i32 : i32, i32
  }
  func.func @transform_7(%arg0: i32) -> (i32, i32) {
    %c0_i32 = arith.constant 0 : i32
    %c0_i32_0 = arith.constant 0 : i32
    return %arg0, %c0_i32 : i32, i32
  }
}

</mosaic_0001>

<llo_original>
// kernel: tpu_custom_call.1
$region0: #{tpu_custom_call.1}
  #allocation0 [shape = 'u32[]', space=smem, size = 0x4, offset = 0x4, fixed_abs, tag = 'smem constant byte address 0x4 - core index']
  #allocation1 [shape = 'u32[144,128]{1,0:T(1,128)}', space=vmem, size = 0x12000, scoped, tag = 'internal scratch']
  %s0 = inlined_call_operand.vmem [shape: f32[8,1], index: 0, kind: input, shape index: {}]
  %s1 = inlined_call_operand.vmem [shape: f32[8,1], index: 1, kind: input, shape index: {}]
  %s2 = inlined_call_operand.vmem [shape: f32[8,4], index: 2, kind: input, shape index: {}]
  %s3 = inlined_call_operand.vmem [shape: f32[6,64], index: 3, kind: input, shape index: {}]
  %s4 = inlined_call_operand.vmem [shape: f32[64,32], index: 4, kind: input, shape index: {}]
  %s5 = inlined_call_operand.vmem [shape: f32[4,128], index: 5, kind: input, shape index: {}]
  %s6 = inlined_call_operand.vmem [shape: f32[8,4], index: 6, kind: output, shape index: {0}]
  %s7 = inlined_call_operand.hbm [shape: f32[8,5], index: 7, kind: output, shape index: {1}]
  %8 = xla_tuple %s6, %s7
  %s9 = sld [smem:[#allocation0]]
  $region42: #{tpu_custom_call.1} parent=0
    _
  %s11 = ssub.s32 1, %s9
  %s12 = scalar_select 0, %s11, %s9
  $region1: #{tpu_custom_call.1} parent=0
    #allocation2 [shape = 'u8[4096]{0}', space=vmem, size = 0x1000, scoped, tag = 'output window, operand 1, single buffered']
    #allocation3 [shape = 's32[1]{0}', space=sflag, size = 0x4, scoped, tag = 'scoped memory for tpu_custom_call.1']
    %13 = vsyncpa [#allocation3], 0
    // Predicated region
    $region2: #{tpu_custom_call.1} parent=1 // pred_check
      _
    $region3: #{tpu_custom_call.1} parent=1 // pred_check_branch
      %15 = sbr.rel (0) target = $region5
    $region4: #{tpu_custom_call.1} parent=1 // pred_region
      _
    $region5: #{tpu_custom_call.1} parent=1 // pred_fallthru
      _
    // Predicated region
    $region6: #{tpu_custom_call.1} parent=1 // pred_check
      _
    $region7: #{tpu_custom_call.1} parent=1 // pred_check_branch
      %17 = sbr.rel (0) target = $region9
    $region8: #{tpu_custom_call.1} parent=1 // pred_region
      _
    $region9: #{tpu_custom_call.1} parent=1 // pred_fallthru
      _
    // Predicated region
    $region10: #{tpu_custom_call.1} parent=1 // pred_check
      _
    $region11: #{tpu_custom_call.1} parent=1 // pred_check_branch
      %19 = sbr.rel (0) target = $region13
    $region12: #{tpu_custom_call.1} parent=1 // pred_region
      _
    $region13: #{tpu_custom_call.1} parent=1 // pred_fallthru
      _
    // Predicated region
    $region14: #{tpu_custom_call.1} parent=1 // pred_check
      _
    $region15: #{tpu_custom_call.1} parent=1 // pred_check_branch
      %21 = sbr.rel (0) target = $region17
    $region16: #{tpu_custom_call.1} parent=1 // pred_region
      _
    $region17: #{tpu_custom_call.1} parent=1 // pred_fallthru
      _
    // Predicated region
    $region18: #{tpu_custom_call.1} parent=1 // pred_check
      _
    $region19: #{tpu_custom_call.1} parent=1 // pred_check_branch
      %23 = sbr.rel (0) target = $region21
    $region20: #{tpu_custom_call.1} parent=1 // pred_region
      _
    $region21: #{tpu_custom_call.1} parent=1 // pred_fallthru
      _
    // Predicated region
    $region22: #{tpu_custom_call.1} parent=1 // pred_check
      _
    $region23: #{tpu_custom_call.1} parent=1 // pred_check_branch
      %25 = sbr.rel (0) target = $region25
    $region24: #{tpu_custom_call.1} parent=1 // pred_region
      _
    $region25: #{tpu_custom_call.1} parent=1 // pred_fallthru
      _
    %v26 = vld [vmem:[%s0] sm:$0xff]
    %v27 = vld [vmem:[%s1] sm:$0xff]
    %v28 = vld [vmem:[%s2] sm:$0xff]
    %v29 = vld [vmem:[%s3] sm:$0x3f]
    %v30 = vld [vmem:[%s5] sm:$0x1]
    %v31 = vld [vmem:[%s5 + $0x1] sm:$0x1]
    %v32 = vld [vmem:[%s5 + $0x2] sm:$0x1]
    %v33 = vld [vmem:[%s5 + $0x3] sm:$0x1]
    %35 = vset.pattern.permute.xlu0 0
    %36 = vperm.xlu0 %35, %v26
    %v37 = vpop.permute.xlu0 %36
    %v39 = vlaneseq
    %v40 = vshrl.u32 %v39, 7
    %v41 = vsub.s32 0, %v40
    %v42 = vrot.slane %v29, %v41
    %v43 = vmul.f32 %v37, %v42
    %v45 = vrot.slane %v29, 2
    %vm46 = vcmask 31744
    %v48 = vsel %vm46, %v28, 0
    %vm50 = vcmask 1043456
    %v51 = vsel %vm50, %v45, 0
    %53 = vmatprep.subr.mxu0 0.0
    %54 = vmatpush1.msra.mxu0 0.0
    %55 = vmatprep.subr.mxu0 0.0
    %56 = vmatpush1.msra.mxu0 0.0
    %57 = vmatprep.subr.mxu0 0.0
    %58 = vmatpush1.msra.mxu0 0.0
    %59 = vmatprep.subr.mxu0 0.0
    %60 = vmatpush1.msra.mxu0 0.0
    %61 = vmatprep.subr.mxu0 0.0
    %62 = vmatpush1.msra.mxu0 0.0
    %63 = vmatprep.subr.mxu0 0.0
    %64 = vmatpush1.msra.mxu0 0.0
    %65 = vmatprep.subr.mxu0 0.0
    %66 = vmatpush1.msra.mxu0 0.0
    %67 = vmatprep.subr.mxu0 0.0
    %68 = vmatpush1.msra.mxu0 0.0
    %69 = vmatprep.subr.mxu0 0.0
    %70 = vmatpush1.msra.mxu0 0.0
    %71 = vmatprep.subr.mxu0 0.0
    %72 = vmatpush1.msra.mxu0 0.0
    %73 = vmatprep.subr.mxu0 0.0
    %74 = vmatpush1.msra.mxu0 0.0
    %75 = vmatprep.subr.mxu0 0.0
    %76 = vmatpush1.msra.mxu0 0.0
    %77 = vmatprep.subr.mxu0 0.0
    %78 = vmatpush1.msra.mxu0 0.0
    %79 = vmatprep.subr.mxu0 0.0
    %80 = vmatpush1.msra.mxu0 0.0
    %81 = vmatprep.subr.mxu0 0.0
    %82 = vmatpush1.msra.mxu0 0.0
    %83 = vmatprep.subr.mxu0 0.0
    %84 = vmatpush1.msra.mxu0 %v51
    %85 = vmatprep.subr.mxu0 0.0
    %86 = vmatpush2.msra.mxu0 0.0
    %87 = vmatprep.subr.mxu0 0.0
    %88 = vmatpush2.msra.mxu0 0.0
    %89 = vmatprep.subr.mxu0 0.0
    %90 = vmatpush2.msra.mxu0 0.0
    %91 = vmatprep.subr.mxu0 0.0
    %92 = vmatpush2.msra.mxu0 0.0
    %93 = vmatprep.subr.mxu0 0.0
    %94 = vmatpush2.msra.mxu0 0.0
    %95 = vmatprep.subr.mxu0 0.0
    %96 = vmatpush2.msra.mxu0 0.0
    %97 = vmatprep.subr.mxu0 0.0
    %98 = vmatpush2.msra.mxu0 0.0
    %99 = vmatprep.subr.mxu0 0.0
    %100 = vmatpush2.msra.mxu0 0.0
    %101 = vmatprep.subr.mxu0 0.0
    %102 = vmatpush2.msra.mxu0 0.0
    %103 = vmatprep.subr.mxu0 0.0
    %104 = vmatpush2.msra.mxu0 0.0
    %105 = vmatprep.subr.mxu0 0.0
    %106 = vmatpush2.msra.mxu0 0.0
    %107 = vmatprep.subr.mxu0 0.0
    %108 = vmatpush2.msra.mxu0 0.0
    %109 = vmatprep.subr.mxu0 0.0
    %110 = vmatpush2.msra.mxu0 0.0
    %111 = vmatprep.subr.mxu0 0.0
    %112 = vmatpush2.msra.mxu0 0.0
    %113 = vmatprep.subr.mxu0 0.0
    %114 = vmatpush2.msra.mxu0 0.0
    %115 = vmatprep.subr.mxu0 0.0
    %116 = vmatpush2.msra.mxu0 0.0
    %117 = vmatprep.mubr.f32.mxu0 0.0
    %118 = vmatmul.mubr.f32.gmra.mxu0 %v48
    %v119 = vpop.f32.mrf.mxu0
    %v120 = vadd.f32 %v43, %v119
    %v121 = vpop.f32.mrf.mxu0
    %122 = vdwg.mxu0
    %124 = vset.pattern.permute.xlu0 0
    %125 = vperm.xlu0 %124, %v27
    %v126 = vpop.permute.xlu0 %125
    %v128 = vlaneseq
    %v129 = vshrl.u32 %v128, 7
    %v130 = vsub.s32 1, %v129
    %v131 = vrot.slane %v29, %v130
    %v132 = vmul.f32 %v126, %v131
    %v133 = vadd.f32 %v120, %v132
    %v134 = vlaneseq
    %v135 = vshrl.u32 %v134, 7
    %v136 = vsub.s32 0, %v135
    %v137 = vrot.slane %v30, %v136
    %v138 = vadd.f32 %v133, %v137
    %v139 = vmax.f32 %v138, 0.0
    %v140 = vld [vmem:[%s4] sm:$0xff]
    %v141 = vld [vmem:[%s4 + $0x8] sm:$0xff]
    %v142 = vld [vmem:[%s4 + $0x10] sm:$0xff]
    %v143 = vld [vmem:[%s4 + $0x18] sm:$0xff]
    %v144 = vld [vmem:[%s4 + $0x20] sm:$0xff]
    %v145 = vld [vmem:[%s4 + $0x28] sm:$0xff]
    %v146 = vld [vmem:[%s4 + $0x30] sm:$0xff]
    %v147 = vld [vmem:[%s4 + $0x38] sm:$0xff]
    %v148 = vlaneseq
    %v149 = vshrl.u32 %v148, 7
    %v150 = vsub.s32 0, %v149
    %v151 = vrot.slane %v31, %v150
    %vm152 = vcmask 523264
    %v154 = vsel %vm152, %v139, 0
    %156 = vmatprep.subr.mxu0 0.0
    %157 = vmatpush1.msra.mxu0 0.0
    %158 = vmatprep.subr.mxu0 0.0
    %159 = vmatpush1.msra.mxu0 0.0
    %160 = vmatprep.subr.mxu0 0.0
    %161 = vmatpush1.msra.mxu0 0.0
    %162 = vmatprep.subr.mxu0 0.0
    %163 = vmatpush1.msra.mxu0 0.0
    %164 = vmatprep.subr.mxu0 0.0
    %165 = vmatpush1.msra.mxu0 0.0
    %166 = vmatprep.subr.mxu0 0.0
    %167 = vmatpush1.msra.mxu0 0.0
    %168 = vmatprep.subr.mxu0 0.0
    %169 = vmatpush1.msra.mxu0 0.0
    %170 = vmatprep.subr.mxu0 0.0
    %171 = vmatpush1.msra.mxu0 0.0
    %172 = vmatprep.subr.mxu0 0.0
    %173 = vmatpush1.msra.mxu0 %v147
    %174 = vmatprep.subr.mxu0 0.0
    %175 = vmatpush1.msra.mxu0 %v146
    %176 = vmatprep.subr.mxu0 0.0
    %177 = vmatpush1.msra.mxu0 %v145
    %178 = vmatprep.subr.mxu0 0.0
    %179 = vmatpush1.msra.mxu0 %v144
    %180 = vmatprep.subr.mxu0 0.0
    %181 = vmatpush1.msra.mxu0 %v143
    %182 = vmatprep.subr.mxu0 0.0
    %183 = vmatpush1.msra.mxu0 %v142
    %184 = vmatprep.subr.mxu0 0.0
    %185 = vmatpush1.msra.mxu0 %v141
    %186 = vmatprep.subr.mxu0 0.0
    %187 = vmatpush1.msra.mxu0 %v140
    %188 = vmatprep.subr.mxu0 0.0
    %189 = vmatpush2.msra.mxu0 0.0
    %190 = vmatprep.subr.mxu0 0.0
    %191 = vmatpush2.msra.mxu0 0.0
    %192 = vmatprep.subr.mxu0 0.0
    %193 = vmatpush2.msra.mxu0 0.0
    %194 = vmatprep.subr.mxu0 0.0
    %195 = vmatpush2.msra.mxu0 0.0
    %196 = vmatprep.subr.mxu0 0.0
    %197 = vmatpush2.msra.mxu0 0.0
    %198 = vmatprep.subr.mxu0 0.0
    %199 = vmatpush2.msra.mxu0 0.0
    %200 = vmatprep.subr.mxu0 0.0
    %201 = vmatpush2.msra.mxu0 0.0
    %202 = vmatprep.subr.mxu0 0.0
    %203 = vmatpush2.msra.mxu0 0.0
    %204 = vmatprep.subr.mxu0 0.0
    %205 = vmatpush2.msra.mxu0 0.0
    %206 = vmatprep.subr.mxu0 0.0
    %207 = vmatpush2.msra.mxu0 0.0
    %208 = vmatprep.subr.mxu0 0.0
    %209 = vmatpush2.msra.mxu0 0.0
    %210 = vmatprep.subr.mxu0 0.0
    %211 = vmatpush2.msra.mxu0 0.0
    %212 = vmatprep.subr.mxu0 0.0
    %213 = vmatpush2.msra.mxu0 0.0
    %214 = vmatprep.subr.mxu0 0.0
    %215 = vmatpush2.msra.mxu0 0.0
    %216 = vmatprep.subr.mxu0 0.0
    %217 = vmatpush2.msra.mxu0 0.0
    %218 = vmatprep.subr.mxu0 0.0
    %219 = vmatpush2.msra.mxu0 0.0
    %220 = vmatprep.mubr.f32.mxu0 0.0
    %221 = vmatmul.mubr.f32.gmra.mxu0 %v154
    %v222 = vpop.f32.mrf.mxu0
    %v223 = vadd.f32 %v151, %v222
    %v224 = vpop.f32.mrf.mxu0
    %225 = vdwg.mxu0
    %v226 = vmax.f32 %v223, 0.0
    %v227 = vlaneseq
    %v228 = vshrl.u32 %v227, 7
    %v229 = vsub.s32 0, %v228
    %v230 = vrot.slane %v32, %v229
    %v231 = vmul.f32 %v226, %v230
    %vm232 = vcmask 261120
    %v233 = vsel %vm232, %v231, 0.0
    %234 = vadd.xlane.f32.xlu0 %v233
    %v235 = vpop.xlane.xlu0 %234
    %v236 = vlaneseq
    %v237 = vshrl.u32 %v236, 7
    %v238 = vsub.s32 0, %v237
    %v239 = vrot.slane %v33, %v238
    %v240 = vadd.f32 %v235, %v239
    %241 = vst.msk [vmem:[%s6] sm:$0xff] %vm46, %v240
    %v242 = vlaneseq
    %v243 = vand.u32 %v242, 127
    %v244 = vxor.u32 %v240, 2147483648
    %v245 = vmul.f32 %v244, 1.442695
    %v246 = vpow.pop %v245
    %v247 = vadd.f32 %v246, 1.0
    %v248 = vrcp.pop %v247
    %v249 = vmul.f32 1.0, %v248
    %250 = vrot.lane.b32.xlu0 %v249, 1
    %v251 = vpop.permute.xlu0 %250
    %vm252 = vcmp.ge.s32.totalorder %v243, 1
    %v253 = vsel %vm252, %v251, 1.0
    %v254 = vmul.f32 %v249, %v253
    %255 = vrot.lane.b32.xlu0 %v254, 2
    %v256 = vpop.permute.xlu0 %255
    %vm257 = vcmp.ge.s32.totalorder %v243, 2
    %v258 = vsel %vm257, %v256, 1.0
    %v259 = vmul.f32 %v254, %v258
    %vm260 = vcmp.eq.s32.totalorder %v243, 0
    %261 = vrot.lane.b32.xlu0 %v259, 1
    %v262 = vpop.permute.xlu0 %261
    %v263 = vsel %vm260, 1.0, %v262
    %vm264 = vcmp.eq.s32.totalorder %v243, 4
    %v265 = vsel %vm264, 0.0, %v259
    %v266 = vsub.f32 %v263, %v265
    %vm267 = vcmask 39936
    %268 = vst.msk [vmem:[#allocation2] sm:$0xff] %vm267, %v266
    // Predicated region
    $region26: #{tpu_custom_call.1} parent=1 // pred_check
      _
    $region27: #{tpu_custom_call.1} parent=1 // pred_check_branch
      %270 = sbr.rel (0) target = $region29
    $region28: #{tpu_custom_call.1} parent=1 // pred_region
      _
    $region29: #{tpu_custom_call.1} parent=1 // pred_fallthru
      _
    // Predicated region
    $region30: #{tpu_custom_call.1} parent=1 // pred_check
      _
    $region31: #{tpu_custom_call.1} parent=1 // pred_check_branch
      %272 = sbr.rel (0) target = $region33
    $region32: #{tpu_custom_call.1} parent=1 // pred_region
      %s274 = ssub.s32 128, 128
      %275 = vsyncadd [#allocation3], %s274
      %s277 = sshll.u32 [#allocation2], 4
      %s278 = int_to_ptr.vmem [resolvable:$true] %s277
      %280 = dma.vmem_to_hbm [thread:$0]  %s278, 128, %s7, [#allocation3]
    $region33: #{tpu_custom_call.1} parent=1 // pred_fallthru
      _
    // Predicated region
    $region34: #{tpu_custom_call.1} parent=1 // pred_check
      _
    $region35: #{tpu_custom_call.1} parent=1 // pred_check_branch
      %282 = sbr.rel (0) target = $region37
    $region36: #{tpu_custom_call.1} parent=1 // pred_region
      _
    $region37: #{tpu_custom_call.1} parent=1 // pred_fallthru
      _
    // Predicated region
    $region38: #{tpu_custom_call.1} parent=1 // pred_check
      _
    $region39: #{tpu_custom_call.1} parent=1 // pred_check_branch
      %284 = sbr.rel (0) target = $region41
    $region40: #{tpu_custom_call.1} parent=1 // pred_region
      %285 = dma.done [#allocation3], 128
    $region41: #{tpu_custom_call.1} parent=1 // pred_fallthru
      _
    %286 = vsyncpa [#allocation3], 1

</llo_original>
